<compile_context>
chip_gen: v7x
topology: tpu7x:2x2x1
jax: 0.10.0
libtpu: 0.0.40
codegen_flags: <defaults>
</compile_context>

<pallas_src>
import jax
import jax.numpy as jnp
from jax import lax
from jax.experimental import pallas as pl
from jax.experimental.pallas import tpu as pltpu


def _make_emd_kernel(N, M, Np, Mp, factorl, factorr):
    """Builds the per-batch-element EMD kernel (one batch element per grid step)."""

    def kernel(xyz1_ref, xyz2t_ref, o_ref):
        # xyz1_ref : (1, Np, 3)  VMEM  (rows >= N are zero padding)
        # xyz2t_ref: (1, 3, Mp)  VMEM  (cols >= M are zero padding)
        # o_ref    : (1, 8, 128) VMEM  (scalar cost broadcast into aligned tile)
        p1 = xyz1_ref[0]          # (Np, 3)
        p2t = xyz2t_ref[0]        # (3, Mp)

        # Pairwise squared distances via the Gram trick on the MXU; clamp
        # against catastrophic cancellation before the sqrt.
        gram = jnp.dot(p1, p2t, preferred_element_type=jnp.float32)       # (Np, Mp)
        n1 = jnp.sum(p1 * p1, axis=1, keepdims=True)                      # (Np, 1)
        n2 = jnp.sum(p2t * p2t, axis=0, keepdims=True)                    # (1, Mp)
        d2 = jnp.maximum(n1 + n2 - 2.0 * gram, 0.0)
        sd = jnp.sqrt(d2)          # only `sd` stays live across the level loop

        # Remaining mass per point; padded rows/cols get zero mass so they
        # never receive matching weight and contribute nothing to the cost.
        row_ids = lax.broadcasted_iota(jnp.int32, (Np, 1), 0)
        col_ids = lax.broadcasted_iota(jnp.int32, (1, Mp), 1)
        satl0 = jnp.where(row_ids < N, factorl, 0.0).astype(jnp.float32)  # (Np, 1)
        satr0 = jnp.where(col_ids < M, factorr, 0.0).astype(jnp.float32)  # (1, Mp)

        ones_m = jnp.ones((Mp, 1), jnp.float32)
        ones_n = jnp.ones((1, Np), jnp.float32)
        costv0 = jnp.zeros((1, Mp), jnp.float32)
        neg_lvl0 = jnp.full((1, 1), 4.0 ** 8, jnp.float32)

        # 11 temperature levels: level = -(4**j) for j = 8..-1, then level = 0.
        def level_body(i, carry):
            satl, satr, costv, neg_lvl = carry
            lvl = jnp.where(i == 10, 0.0, -neg_lvl)          # (1, 1)
            d2l = sd * sd                                     # cheap VPU re-square
            weight = jnp.exp(lvl * d2l) * satr                # (Np, Mp), EUP exp
            # Row/col reductions on the (otherwise idle) MXU instead of the XLU.
            s = jnp.dot(weight, ones_m,
                        preferred_element_type=jnp.float32) + 1e-9        # (Np, 1)
            weight = weight * (pl.reciprocal(s, approx=True) * satl)
            ss = jnp.dot(ones_n, weight,
                         preferred_element_type=jnp.float32) + 1e-9       # (1, Mp)
            r = jnp.minimum(satr * pl.reciprocal(ss, approx=True), 1.0)   # (1, Mp)
            w = weight * r                                                # (Np, Mp)
            # Fold matchcost into the loop: no persistent (Np, Mp) `match`.
            costv = costv + jnp.dot(ones_n, w * sd,
                                    preferred_element_type=jnp.float32)
            satl = jnp.maximum(
                satl - jnp.dot(w, ones_m, preferred_element_type=jnp.float32), 0.0)
            satr = jnp.maximum(
                satr - jnp.dot(ones_n, w, preferred_element_type=jnp.float32), 0.0)
            return satl, satr, costv, neg_lvl * 0.25

        _, _, costv, _ = lax.fori_loop(
            0, 11, level_body, (satl0, satr0, costv0, neg_lvl0))

        cost = jnp.sum(costv)      # single cross-lane reduce, once per batch elem
        o_ref[...] = jnp.broadcast_to(cost, o_ref.shape).astype(jnp.float32)

    return kernel


def emd_loss(xyz1, xyz2):
    """Approximate EMD. xyz1: (B, N, 3), xyz2: (B, M, 3) -> cost: (B,) float32."""
    # TODO(synk): forward pass only (the PyTorch autograd.Function's custom
    # backward via the saved `match` matrix is out of scope here).
    B, N, _ = xyz1.shape
    B2, M, _ = xyz2.shape
    assert B == B2

    # approxmatch mass multipliers (integer ratio as in the reference extension).
    factorl = float(max(N, M) // N)
    factorr = float(max(N, M) // M)

    # Pad to lane/sublane-dense shapes: N -> multiple of 8, M -> multiple of 128.
    Np = ((N + 7) // 8) * 8
    Mp = ((M + 127) // 128) * 128

    xyz1 = xyz1.astype(jnp.float32)
    xyz2_t = jnp.transpose(xyz2.astype(jnp.float32), (0, 2, 1))   # (B, 3, M)
    if Np != N:
        xyz1 = jnp.pad(xyz1, ((0, 0), (0, Np - N), (0, 0)))
    if Mp != M:
        xyz2_t = jnp.pad(xyz2_t, ((0, 0), (0, 0), (0, Mp - M)))

    # Raise the scoped-VMEM cap only when the per-batch working set needs it.
    # TODO(synk): for very large clouds (N=M >= ~2048, esp. v7x 64 MiB VMEM)
    # tile the M axis with a second "arbitrary" grid axis / emit_pipeline
    # instead of keeping full (Np, Mp) temporaries resident.
    est_bytes = (6 * Np * Mp + 4 * (Np * 3 + 3 * Mp)) * 4 + (2 << 20)
    vmem_limit = min(est_bytes, 64 << 20) if est_bytes > (16 << 20) else None

    kernel = _make_emd_kernel(N, M, Np, Mp, factorl, factorr)
    out = pl.pallas_call(
        kernel,
        out_shape=jax.ShapeDtypeStruct((B, 8, 128), jnp.float32),
        grid=(B,),
        in_specs=[
            pl.BlockSpec((1, Np, 3), lambda b: (b, 0, 0)),
            pl.BlockSpec((1, 3, Mp), lambda b: (b, 0, 0)),
        ],
        out_specs=pl.BlockSpec((1, 8, 128), lambda b: (b, 0, 0)),
        compiler_params=pltpu.CompilerParams(
            dimension_semantics=("parallel",),
            vmem_limit_bytes=vmem_limit),
    )(xyz1, xyz2_t)
    return out[:, 0, 0]


if __name__ == "__main__":
    key = jax.random.PRNGKey(0)
    k1, k2 = jax.random.split(key)
    B, N, M = 2, 64, 64
    xyz1 = jax.random.uniform(k1, (B, N, 3), jnp.float32, minval=-1.0, maxval=1.0)
    xyz2 = jax.random.uniform(k2, (B, M, 3), jnp.float32, minval=-1.0, maxval=1.0)

    cost = emd_loss(xyz1, xyz2)
    jax.block_until_ready(cost)
    assert cost.shape == (B,)
    assert bool(jnp.all(jnp.isfinite(cost)))
    print("KERNEL_OK")
</pallas_src>

<mosaic_0001>
module attributes {stable_mosaic.version = 11 : i64} {
  func.func @kernel(%arg0: i32, %arg1: memref<1x64x3xf32, #tpu.memory_space<vmem>>, %arg2: memref<1x3x128xf32, #tpu.memory_space<vmem>>, %arg3: memref<1x8x128xf32, #tpu.memory_space<vmem>>) attributes {dimension_semantics = [#tpu.dimension_semantics<parallel>], iteration_bounds = array<i64: 2>, scalar_prefetch = 0 : i64, scratch_operands = 0 : i64, tpu.core_type = #tpu.core_type<tc>, window_params = [{transform_indices = @transform_0, window_bounds = array<i64: 1, 64, 3>}, {transform_indices = @transform_1, window_bounds = array<i64: 1, 3, 128>}, {transform_indices = @transform_2, window_bounds = array<i64: 1, 8, 128>}]} {
    %c0 = arith.constant 0 : index
    %c0_0 = arith.constant 0 : index
    %c0_1 = arith.constant 0 : index
    %0 = vector.load %arg1[%c0, %c0_0, %c0_1] : memref<1x64x3xf32, #tpu.memory_space<vmem>>, vector<1x64x3xf32>
    %1 = vector.shape_cast %0 : vector<1x64x3xf32> to vector<64x3xf32>
    %c0_2 = arith.constant 0 : index
    %c0_3 = arith.constant 0 : index
    %c0_4 = arith.constant 0 : index
    %2 = vector.load %arg2[%c0_2, %c0_3, %c0_4] : memref<1x3x128xf32, #tpu.memory_space<vmem>>, vector<1x3x128xf32>
    %3 = vector.shape_cast %2 : vector<1x3x128xf32> to vector<3x128xf32>
    %cst = arith.constant dense<0.000000e+00> : vector<64x128xf32>
    %4 = tpu.matmul %1, %3, %cst {dimension_numbers = #tpu.dot_dimension_numbers<[1], [0], [0], [1], [0, 0, 1, 1], [], []>} : vector<64x3xf32>, vector<3x128xf32>, vector<64x128xf32> -> vector<64x128xf32>
    %5 = arith.mulf %1, %1 : vector<64x3xf32>
    %cst_5 = arith.constant dense<0.000000e+00> : vector<64xf32>
    %6 = vector.multi_reduction <add>, %5, %cst_5 [1] : vector<64x3xf32> to vector<64xf32>
    %7 = vector.shape_cast %6 : vector<64xf32> to vector<64x1xf32>
    %8 = arith.mulf %3, %3 : vector<3x128xf32>
    %cst_6 = arith.constant dense<0.000000e+00> : vector<128xf32>
    %9 = vector.multi_reduction <add>, %8, %cst_6 [0] : vector<3x128xf32> to vector<128xf32>
    %10 = vector.shape_cast %9 : vector<128xf32> to vector<1x128xf32>
    %11 = vector.broadcast %7 : vector<64x1xf32> to vector<64x128xf32>
    %12 = vector.broadcast %10 : vector<1x128xf32> to vector<64x128xf32>
    %13 = arith.addf %11, %12 : vector<64x128xf32>
    %cst_7 = arith.constant 2.000000e+00 : f32
    %14 = vector.broadcast %cst_7 : f32 to vector<64x128xf32>
    %15 = arith.mulf %14, %4 : vector<64x128xf32>
    %16 = arith.subf %13, %15 : vector<64x128xf32>
    %cst_8 = arith.constant 0.000000e+00 : f32
    %17 = vector.broadcast %cst_8 : f32 to vector<64x128xf32>
    %18 = arith.maximumf %16, %17 : vector<64x128xf32>
    %19 = math.sqrt %18 : vector<64x128xf32>
    %20 = tpu.iota {dimensions = array<i32: 0>} : vector<64x1xi32>
    %21 = tpu.iota {dimensions = array<i32: 1>} : vector<1x128xi32>
    %c64_i32 = arith.constant 64 : i32
    %22 = vector.broadcast %c64_i32 : i32 to vector<64x1xi32>
    %23 = arith.cmpi slt, %20, %22 : vector<64x1xi32>
    %cst_9 = arith.constant 1.000000e+00 : f32
    %cst_10 = arith.constant 0.000000e+00 : f32
    %24 = vector.broadcast %cst_9 : f32 to vector<64x1xf32>
    %25 = vector.broadcast %cst_10 : f32 to vector<64x1xf32>
    %26 = arith.select %23, %24, %25 : vector<64x1xi1>, vector<64x1xf32>
    %c64_i32_11 = arith.constant 64 : i32
    %27 = vector.broadcast %c64_i32_11 : i32 to vector<1x128xi32>
    %28 = arith.cmpi slt, %21, %27 : vector<1x128xi32>
    %cst_12 = arith.constant 1.000000e+00 : f32
    %cst_13 = arith.constant 0.000000e+00 : f32
    %29 = vector.broadcast %cst_12 : f32 to vector<1x128xf32>
    %30 = vector.broadcast %cst_13 : f32 to vector<1x128xf32>
    %31 = arith.select %28, %29, %30 : vector<1x128xi1>, vector<1x128xf32>
    %cst_14 = arith.constant 1.000000e+00 : f32
    %32 = vector.broadcast %cst_14 : f32 to vector<128x1xf32>
    %cst_15 = arith.constant 1.000000e+00 : f32
    %33 = vector.broadcast %cst_15 : f32 to vector<1x64xf32>
    %cst_16 = arith.constant 0.000000e+00 : f32
    %34 = vector.broadcast %cst_16 : f32 to vector<1x128xf32>
    %cst_17 = arith.constant 6.553600e+04 : f32
    %35 = vector.broadcast %cst_17 : f32 to vector<1x1xf32>
    %c0_i32 = arith.constant 0 : i32
    %c11_i32 = arith.constant 11 : i32
    %36 = arith.addi %c0_i32, %c11_i32 : i32
    %c1_i32 = arith.constant 1 : i32
    %37:4 = scf.for %arg4 = %c0_i32 to %36 step %c1_i32 iter_args(%arg5 = %26, %arg6 = %31, %arg7 = %34, %arg8 = %35) -> (vector<64x1xf32>, vector<1x128xf32>, vector<1x128xf32>, vector<1x1xf32>)  : i32 {
      %c10_i32 = arith.constant 10 : i32
      %44 = arith.cmpi eq, %arg4, %c10_i32 : i32
      %cst_23 = arith.constant 0.000000e+00 : f32
      %45 = vector.broadcast %cst_23 : f32 to vector<1x1xf32>
      %46 = arith.subf %45, %arg8 : vector<1x1xf32>
      %cst_24 = arith.constant 0.000000e+00 : f32
      %47 = vector.broadcast %cst_24 : f32 to vector<1x1xf32>
      %48 = arith.select %44, %47, %46 : vector<1x1xf32>
      %49 = arith.mulf %19, %19 : vector<64x128xf32>
      %50 = vector.broadcast %48 : vector<1x1xf32> to vector<64x128xf32>
      %51 = arith.mulf %50, %49 : vector<64x128xf32>
      %52 = math.exp %51 : vector<64x128xf32>
      %53 = vector.broadcast %arg6 : vector<1x128xf32> to vector<64x128xf32>
      %54 = arith.mulf %52, %53 : vector<64x128xf32>
      %cst_25 = arith.constant dense<0.000000e+00> : vector<64x1xf32>
      %55 = tpu.matmul %54, %32, %cst_25 {dimension_numbers = #tpu.dot_dimension_numbers<[1], [0], [0], [1], [0, 0, 1, 1], [], []>} : vector<64x128xf32>, vector<128x1xf32>, vector<64x1xf32> -> vector<64x1xf32>
      %cst_26 = arith.constant 9.99999971E-10 : f32
      %56 = vector.broadcast %cst_26 : f32 to vector<64x1xf32>
      %57 = arith.addf %55, %56 : vector<64x1xf32>
      %58 = tpu.reciprocal %57 {approx = true} : vector<64x1xf32> -> vector<64x1xf32>
      %59 = arith.mulf %58, %arg5 : vector<64x1xf32>
      %60 = vector.broadcast %59 : vector<64x1xf32> to vector<64x128xf32>
      %61 = arith.mulf %54, %60 : vector<64x128xf32>
      %cst_27 = arith.constant dense<0.000000e+00> : vector<1x128xf32>
      %62 = tpu.matmul %33, %61, %cst_27 {dimension_numbers = #tpu.dot_dimension_numbers<[1], [0], [0], [1], [0, 0, 1, 1], [], []>} : vector<1x64xf32>, vector<64x128xf32>, vector<1x128xf32> -> vector<1x128xf32>
      %cst_28 = arith.constant 9.99999971E-10 : f32
      %63 = vector.broadcast %cst_28 : f32 to vector<1x128xf32>
      %64 = arith.addf %62, %63 : vector<1x128xf32>
      %65 = tpu.reciprocal %64 {approx = true} : vector<1x128xf32> -> vector<1x128xf32>
      %66 = arith.mulf %arg6, %65 : vector<1x128xf32>
      %cst_29 = arith.constant 1.000000e+00 : f32
      %67 = vector.broadcast %cst_29 : f32 to vector<1x128xf32>
      %68 = arith.minimumf %66, %67 : vector<1x128xf32>
      %69 = vector.broadcast %68 : vector<1x128xf32> to vector<64x128xf32>
      %70 = arith.mulf %61, %69 : vector<64x128xf32>
      %71 = arith.mulf %70, %19 : vector<64x128xf32>
      %cst_30 = arith.constant dense<0.000000e+00> : vector<1x128xf32>
      %72 = tpu.matmul %33, %71, %cst_30 {dimension_numbers = #tpu.dot_dimension_numbers<[1], [0], [0], [1], [0, 0, 1, 1], [], []>} : vector<1x64xf32>, vector<64x128xf32>, vector<1x128xf32> -> vector<1x128xf32>
      %73 = arith.addf %arg7, %72 : vector<1x128xf32>
      %cst_31 = arith.constant dense<0.000000e+00> : vector<64x1xf32>
      %74 = tpu.matmul %70, %32, %cst_31 {dimension_numbers = #tpu.dot_dimension_numbers<[1], [0], [0], [1], [0, 0, 1, 1], [], []>} : vector<64x128xf32>, vector<128x1xf32>, vector<64x1xf32> -> vector<64x1xf32>
      %75 = arith.subf %arg5, %74 : vector<64x1xf32>
      %cst_32 = arith.constant 0.000000e+00 : f32
      %76 = vector.broadcast %cst_32 : f32 to vector<64x1xf32>
      %77 = arith.maximumf %75, %76 : vector<64x1xf32>
      %cst_33 = arith.constant dense<0.000000e+00> : vector<1x128xf32>
      %78 = tpu.matmul %33, %70, %cst_33 {dimension_numbers = #tpu.dot_dimension_numbers<[1], [0], [0], [1], [0, 0, 1, 1], [], []>} : vector<1x64xf32>, vector<64x128xf32>, vector<1x128xf32> -> vector<1x128xf32>
      %79 = arith.subf %arg6, %78 : vector<1x128xf32>
      %cst_34 = arith.constant 0.000000e+00 : f32
      %80 = vector.broadcast %cst_34 : f32 to vector<1x128xf32>
      %81 = arith.maximumf %79, %80 : vector<1x128xf32>
      %cst_35 = arith.constant 2.500000e-01 : f32
      %82 = vector.broadcast %cst_35 : f32 to vector<1x1xf32>
      %83 = arith.mulf %arg8, %82 : vector<1x1xf32>
      scf.yield %77, %81, %73, %83 : vector<64x1xf32>, vector<1x128xf32>, vector<1x128xf32>, vector<1x1xf32>
    }
    %c11_i32_18 = arith.constant 11 : i32
    %38 = vector.shape_cast %37#2 : vector<1x128xf32> to vector<1x1x128xf32>
    %cst_19 = arith.constant dense<0.000000e+00> : vector<1xf32>
    %39 = vector.multi_reduction <add>, %38, %cst_19 [1, 2] : vector<1x1x128xf32> to vector<1xf32>
    %40 = vector.shape_cast %39 : vector<1xf32> to vector<1x1x1xf32>
    %41 = vector.extract %40[0, 0, 0] : f32 from vector<1x1x1xf32>
    %42 = vector.broadcast %41 : f32 to vector<1x8x128xf32>
    %c0_20 = arith.constant 0 : index
    %c0_21 = arith.constant 0 : index
    %c0_22 = arith.constant 0 : index
    %43 = vector.load %arg3[%c0_20, %c0_21, %c0_22] : memref<1x8x128xf32, #tpu.memory_space<vmem>>, vector<1x8x128xf32>
    tpu.vector_store %arg3[%c0_20, %c0_21, %c0_22], %42 {strides = array<i32>} : memref<1x8x128xf32, #tpu.memory_space<vmem>>, vector<1x8x128xf32>,
    return
  }
  func.func @transform_0(%arg0: i32) -> (i32, i32, i32) {
    %c0_i32 = arith.constant 0 : i32
    %c0_i32_0 = arith.constant 0 : i32
    %c0_i32_1 = arith.constant 0 : i32
    return %arg0, %c0_i32, %c0_i32_0 : i32, i32, i32
  }
  func.func @transform_1(%arg0: i32) -> (i32, i32, i32) {
    %c0_i32 = arith.constant 0 : i32
    %c0_i32_0 = arith.constant 0 : i32
    %c0_i32_1 = arith.constant 0 : i32
    return %arg0, %c0_i32, %c0_i32_0 : i32, i32, i32
  }
  func.func @transform_2(%arg0: i32) -> (i32, i32, i32) {
    %c0_i32 = arith.constant 0 : i32
    %c0_i32_0 = arith.constant 0 : i32
    %c0_i32_1 = arith.constant 0 : i32
    return %arg0, %c0_i32, %c0_i32_0 : i32, i32, i32
  }
}

</mosaic_0001>

<llo_original>
// kernel: tpu_custom_call.1
$region0: #{tpu_custom_call.1}
  #allocation0 [shape = 'u32[]', space=smem, size = 0x4, offset = 0x4, fixed_abs, tag = 'smem constant byte address 0x4 - core index']
  #allocation1 [shape = 'u32[144,128]{1,0:T(1,128)}', space=vmem, size = 0x12000, scoped, tag = 'internal scratch']
  %s0 = inlined_call_operand.vmem [shape: f32[2,64,3], index: 0, kind: input, shape index: {}]
  %s1 = inlined_call_operand.vmem [shape: f32[2,3,128], index: 1, kind: input, shape index: {}]
  %s2 = inlined_call_operand.hbm [shape: f32[2,8,128], index: 2, kind: output, shape index: {}]
  %s3 = sld [smem:[#allocation0]]
  $region48: #{tpu_custom_call.1} parent=0
    _
  %s5 = ssub.s32 1, %s3
  %s6 = scalar_select 0, %s5, %s3
  $region1: #{tpu_custom_call.1} parent=0
    #allocation2 [shape = 'u8[8192]{0}', space=vmem, size = 0x2000, scoped, tag = 'output window, operand 0']
    #allocation3 [shape = 's32[2]{0}', space=sflag, size = 0x8, scoped, tag = 'scoped memory for tpu_custom_call.1']
    %7 = vsyncpa [#allocation3], 0
    %s8 = scalar_lea.sflag [#allocation3], 1
    %9 = vsyncpa %s8, 0
    loop: start=0, step=1, limit=4
    $region2: #{tpu_custom_call.1} parent=1 // loop_pre_header
      _
    $region3: #{tpu_custom_call.1} parent=1 // loop_header
      %s11 = sphi 0, %s15
      %p12 = scmp.ge.s32.totalorder %s11, 4
      %s21 = sphi 0, %s23
      %s24 = sphi 0, %s21
      %s25 = sphi 0, %s24
      %s41 = sphi 0, %s25
      %s47 = sphi 0, %s49
      %s50 = sphi 0, %s47
      %s51 = sphi 0, %s50
      %s67 = sphi 0, %s51
      %s73 = sphi 0, %s75
      %s76 = sphi 0, %s73
      %s77 = sphi 0, %s76
      %s93 = sphi 0, %s77
    $region4: #{tpu_custom_call.1} parent=1 // loop_header_branch
      %14 = sbr.rel (%p12) target = $region8
    $region5: #{tpu_custom_call.1} parent=1 // loop_body
      %s16 = ssub.s32 %s11, 1
      %s17 = ssub.s32 %s11, 2
      %s18 = sadd.s32 %s11, 1
      %s19 = ssub.s32 %s11, %s18
      %p20 = scmp.eq.s32.totalorder %s19, 0
      %s22 = sadd.s32 %s21, 1
      %s23 = scalar_select %p20, %s21, %s22
      %p26 = pneg %p20
      %p27 = scmp.eq.s32.totalorder %s11, 1
      %p28 = por %p26, %p27
      %p29 = scmp.ne.s32.totalorder %s21, %s24
      %p30 = scmp.eq.s32.totalorder %s11, 0
      %p31 = por %p29, %p30
      %p32 = scmp.ne.s32.totalorder %s21, %s24
      %p33 = scmp.eq.s32.totalorder %s16, 1
      %p34 = por %p32, %p33
      %p35 = scmp.ne.s32.totalorder %s24, %s25
      %p36 = scmp.eq.s32.totalorder %s16, 0
      %p37 = por %p35, %p36
      %p38 = scmp.ne.s32.totalorder %s24, %s25
      %p39 = scmp.eq.s32.totalorder %s17, 1
      %p40 = por %p38, %p39
      %p42 = scmp.ne.s32.totalorder %s25, %s41
      %p43 = scmp.eq.s32.totalorder %s17, 0
      %p44 = por %p42, %p43
      %s45 = ssub.s32 %s11, %s18
      %p46 = scmp.eq.s32.totalorder %s45, 0
      %s48 = sadd.s32 %s47, 1
      %s49 = scalar_select %p46, %s47, %s48
      %p52 = pneg %p46
      %p53 = scmp.eq.s32.totalorder %s11, 1
      %p54 = por %p52, %p53
      %p55 = scmp.ne.s32.totalorder %s47, %s50
      %p56 = scmp.eq.s32.totalorder %s11, 0
      %p57 = por %p55, %p56
      %p58 = scmp.ne.s32.totalorder %s47, %s50
      %p59 = scmp.eq.s32.totalorder %s16, 1
      %p60 = por %p58, %p59
      %p61 = scmp.ne.s32.totalorder %s50, %s51
      %p62 = scmp.eq.s32.totalorder %s16, 0
      %p63 = por %p61, %p62
      %p64 = scmp.ne.s32.totalorder %s50, %s51
      %p65 = scmp.eq.s32.totalorder %s17, 1
      %p66 = por %p64, %p65
      %p68 = scmp.ne.s32.totalorder %s51, %s67
      %p69 = scmp.eq.s32.totalorder %s17, 0
      %p70 = por %p68, %p69
      %s71 = ssub.s32 %s11, %s18
      %p72 = scmp.eq.s32.totalorder %s71, 0
      %s74 = sadd.s32 %s73, 1
      %s75 = scalar_select %p72, %s73, %s74
      %p78 = pneg %p72
      %p79 = scmp.eq.s32.totalorder %s11, 1
      %p80 = por %p78, %p79
      %p81 = scmp.ne.s32.totalorder %s73, %s76
      %p82 = scmp.eq.s32.totalorder %s11, 0
      %p83 = por %p81, %p82
      %p84 = scmp.ne.s32.totalorder %s73, %s76
      %p85 = scmp.eq.s32.totalorder %s16, 1
      %p86 = por %p84, %p85
      %p87 = scmp.ne.s32.totalorder %s76, %s77
      %p88 = scmp.eq.s32.totalorder %s16, 0
      %p89 = por %p87, %p88
      %p90 = scmp.ne.s32.totalorder %s76, %s77
      %p91 = scmp.eq.s32.totalorder %s17, 1
      %p92 = por %p90, %p91
      %p94 = scmp.ne.s32.totalorder %s77, %s93
      %p95 = scmp.eq.s32.totalorder %s17, 0
      %p96 = por %p94, %p95
      %p97 = scmp.le.s32.totalorder 1, %s11
      %p98 = scmp.lt.s32.totalorder %s11, 3
      %p99 = pnand %p97, %p98
      %p100 = pneg %p99
      // Predicated region
      $region9: #{tpu_custom_call.1} parent=5 // pred_check
        _
      $region10: #{tpu_custom_call.1} parent=5 // pred_check_branch
        %102 = sbr.rel (%p99) target = $region12
      $region11: #{tpu_custom_call.1} parent=5 // pred_region
        %s103 = ssub.s32 %s11, 1
      $region12: #{tpu_custom_call.1} parent=5 // pred_fallthru
        _
      %p104 = scmp.lt.s32.totalorder %s11, 2
      // Predicated region
      $region13: #{tpu_custom_call.1} parent=5 // pred_check
        %p105 = pneg %p104
      $region14: #{tpu_custom_call.1} parent=5 // pred_check_branch
        %107 = sbr.rel (%p105) target = $region16
      $region15: #{tpu_custom_call.1} parent=5 // pred_region
        // Predicated region
        $region17: #{tpu_custom_call.1} parent=15 // pred_check
          %p108 = pneg %p31
        $region18: #{tpu_custom_call.1} parent=15 // pred_check_branch
          %110 = sbr.rel (%p108) target = $region20
        $region19: #{tpu_custom_call.1} parent=15 // pred_region
          %p111 = scmp.lt.s32.totalorder %s11, 1
          %s112 = scalar_select %p111, %s11, 1
          %s113 = smul.addr %s112, 8
          %s114 = smul.addr %s113, 8
          %s115 = scalar_lea.vmem %s0, %s114
        $region20: #{tpu_custom_call.1} parent=15 // pred_fallthru
          _
        // Predicated region
        $region21: #{tpu_custom_call.1} parent=15 // pred_check
          %p116 = pneg %p57
        $region22: #{tpu_custom_call.1} parent=15 // pred_check_branch
          %118 = sbr.rel (%p116) target = $region24
        $region23: #{tpu_custom_call.1} parent=15 // pred_region
          %p119 = scmp.lt.s32.totalorder %s11, 1
          %s120 = scalar_select %p119, %s11, 1
          %s121 = smul.addr %s120, 4
          %s122 = scalar_lea.vmem %s1, %s121
        $region24: #{tpu_custom_call.1} parent=15 // pred_fallthru
          _
      $region16: #{tpu_custom_call.1} parent=5 // pred_fallthru
        _
      %p123 = scmp.le.s32.totalorder 1, %s11
      %p124 = scmp.lt.s32.totalorder %s11, 3
      %p125 = pnand %p123, %p124
      %p126 = pneg %p125
      // Predicated region
      $region25: #{tpu_custom_call.1} parent=5 // pred_check
        _
      $region26: #{tpu_custom_call.1} parent=5 // pred_check_branch
        %128 = sbr.rel (%p125) target = $region28
      $region27: #{tpu_custom_call.1} parent=5 // pred_region
        %s129 = ssub.s32 %s11, 1
        %p130 = scmp.lt.s32.totalorder %s16, 1
        %s131 = scalar_select %p130, %s16, 1
        %s132 = smul.addr %s131, 8
        %s133 = smul.addr %s132, 8
        %s134 = scalar_lea.vmem %s0, %s133
        %p135 = pneg %p37
        %p136 = pneg %p34
        %p137 = scmp.lt.s32.totalorder %s16, 1
        %s138 = scalar_select %p137, %s16, 1
        %s139 = smul.addr %s138, 4
        %s140 = scalar_lea.vmem %s1, %s139
        %p141 = pneg %p63
        %p142 = pneg %p60
        %p143 = pneg %p89
        %p144 = pneg %p86
        %s145 = sand.u32 %s76, 1
        %s146 = scalar_lea.sflag [#allocation3], %s145
        %s147 = sand.u32 %s76, 1
        %s148 = smul.addr %s147, 8
        %s149 = scalar_lea.vmem [#allocation2], %s148
        %p150 = scmp.lt.s32.totalorder %s16, 1
        %s151 = scalar_select %p150, %s16, 1
        %s152 = smul.addr %s151, 8
        %s153 = smul.addr %s152, 8
        %s154 = scalar_lea.vmem %s0, %s153
        %p155 = scmp.lt.s32.totalorder %s16, 1
        %s156 = scalar_select %p155, %s16, 1
        %s157 = smul.addr %s156, 4
        %s158 = scalar_lea.vmem %s1, %s157
        %v159 = vld [vmem:[%s154] sm:$0xff]
        %v160 = vld [vmem:[%s154 + $0x8] sm:$0xff]
        %v161 = vld [vmem:[%s154 + $0x10] sm:$0xff]
        %v162 = vld [vmem:[%s154 + $0x18] sm:$0xff]
        %v163 = vld [vmem:[%s154 + $0x20] sm:$0xff]
        %v164 = vld [vmem:[%s154 + $0x28] sm:$0xff]
        %v165 = vld [vmem:[%s154 + $0x30] sm:$0xff]
        %v166 = vld [vmem:[%s154 + $0x38] sm:$0xff]
        %v167 = vld [vmem:[%s158] sm:$0x7]
        %vm168 = vcmask 23552
        %v170 = vsel %vm168, %v159, 0
        %v173 = vsel %vm168, %v160, 0
        %v176 = vsel %vm168, %v161, 0
        %v179 = vsel %vm168, %v162, 0
        %v182 = vsel %vm168, %v163, 0
        %v185 = vsel %vm168, %v164, 0
        %v188 = vsel %vm168, %v165, 0
        %v191 = vsel %vm168, %v166, 0
        %vm193 = vcmask 1042432
        %v195 = vsel %vm193, %v167, 0
        %197 = vmatprep.subr.mxu0 0.0
        %198 = vmatpush1.msra.mxu0 %v195
        %199 = vmatprep.subr.mxu0 0.0
        %200 = vmatpush1.msra.mxu0 0.0
        %201 = vmatprep.subr.mxu0 0.0
        %202 = vmatpush1.msra.mxu0 0.0
        %203 = vmatprep.subr.mxu0 0.0
        %204 = vmatpush1.msra.mxu0 0.0
        %205 = vmatprep.subr.mxu0 0.0
        %206 = vmatpush1.msra.mxu0 0.0
        %207 = vmatprep.subr.mxu0 0.0
        %208 = vmatpush1.msra.mxu0 0.0
        %209 = vmatprep.subr.mxu0 0.0
        %210 = vmatpush1.msra.mxu0 0.0
        %211 = vmatprep.subr.mxu0 0.0
        %212 = vmatpush1.msra.mxu0 0.0
        %213 = vmatprep.subr.mxu0 0.0
        %214 = vmatpush1.msra.mxu0 0.0
        %215 = vmatprep.subr.mxu0 0.0
        %216 = vmatpush1.msra.mxu0 0.0
        %217 = vmatprep.subr.mxu0 0.0
        %218 = vmatpush1.msra.mxu0 0.0
        %219 = vmatprep.subr.mxu0 0.0
        %220 = vmatpush1.msra.mxu0 0.0
        %221 = vmatprep.subr.mxu0 0.0
        %222 = vmatpush1.msra.mxu0 0.0
        %223 = vmatprep.subr.mxu0 0.0
        %224 = vmatpush1.msra.mxu0 0.0
        %225 = vmatprep.subr.mxu0 0.0
        %226 = vmatpush1.msra.mxu0 0.0
        %227 = vmatprep.subr.mxu0 0.0
        %228 = vmatpush1.msra.mxu0 0.0
        %229 = vmatprep.subr.mxu0 0.0
        %230 = vmatpush1.msra.mxu0 0.0
        %231 = vmatprep.subr.mxu0 0.0
        %232 = vmatpush1.msra.mxu0 0.0
        %233 = vmatprep.subr.mxu0 0.0
        %234 = vmatpush1.msra.mxu0 0.0
        %235 = vmatprep.subr.mxu0 0.0
        %236 = vmatpush1.msra.mxu0 0.0
        %237 = vmatprep.subr.mxu0 0.0
        %238 = vmatpush1.msra.mxu0 0.0
        %239 = vmatprep.subr.mxu0 0.0
        %240 = vmatpush1.msra.mxu0 0.0
        %241 = vmatprep.subr.mxu0 0.0
        %242 = vmatpush1.msra.mxu0 0.0
        %243 = vmatprep.subr.mxu0 0.0
        %244 = vmatpush1.msra.mxu0 0.0
        %245 = vmatprep.subr.mxu0 0.0
        %246 = vmatpush1.msra.mxu0 0.0
        %247 = vmatprep.subr.mxu0 0.0
        %248 = vmatpush1.msra.mxu0 0.0
        %249 = vmatprep.subr.mxu0 0.0
        %250 = vmatpush1.msra.mxu0 0.0
        %251 = vmatprep.subr.mxu0 0.0
        %252 = vmatpush1.msra.mxu0 0.0
        %253 = vmatprep.subr.mxu0 0.0
        %254 = vmatpush1.msra.mxu0 0.0
        %255 = vmatprep.subr.mxu0 0.0
        %256 = vmatpush1.msra.mxu0 0.0
        %257 = vmatprep.subr.mxu0 0.0
        %258 = vmatpush1.msra.mxu0 0.0
        %259 = vmatprep.subr.mxu0 0.0
        %260 = vmatpush1.msra.mxu0 0.0
        %261 = vmatprep.mubr.f32.mxu0 0.0
        %262 = vmatmul.mubr.f32.gmra.mrb[0].mxu0 %v170
        %v263 = vpop.f32.mrb[0].mxu0
        %v264 = vadd.f32 0.0, %v263
        %v265 = vpop.f32.mrb[0].mxu0
        %266 = vmatprep.mubr.f32.mxu0 0.0
        %267 = vmatmul.mubr.f32.gmra.mrb[0].mxu0 %v173
        %v268 = vpop.f32.mrb[0].mxu0
        %v269 = vadd.f32 0.0, %v268
        %v270 = vpop.f32.mrb[0].mxu0
        %271 = vmatprep.mubr.f32.mxu0 0.0
        %272 = vmatmul.mubr.f32.gmra.mrb[0].mxu0 %v176
        %v273 = vpop.f32.mrb[0].mxu0
        %v274 = vadd.f32 0.0, %v273
        %v275 = vpop.f32.mrb[0].mxu0
        %276 = vmatprep.mubr.f32.mxu0 0.0
        %277 = vmatmul.mubr.f32.gmra.mrb[0].mxu0 %v179
        %v278 = vpop.f32.mrb[0].mxu0
        %v279 = vadd.f32 0.0, %v278
        %v280 = vpop.f32.mrb[0].mxu0
        %281 = vmatprep.mubr.f32.mxu0 0.0
        %282 = vmatmul.mubr.f32.gmra.mrb[0].mxu0 %v182
        %v283 = vpop.f32.mrb[0].mxu0
        %v284 = vadd.f32 0.0, %v283
        %v285 = vpop.f32.mrb[0].mxu0
        %286 = vmatprep.mubr.f32.mxu0 0.0
        %287 = vmatmul.mubr.f32.gmra.mrb[0].mxu0 %v185
        %v288 = vpop.f32.mrb[0].mxu0
        %v289 = vadd.f32 0.0, %v288
        %v290 = vpop.f32.mrb[0].mxu0
        %291 = vmatprep.mubr.f32.mxu0 0.0
        %292 = vmatmul.mubr.f32.gmra.mrb[0].mxu0 %v188
        %v293 = vpop.f32.mrb[0].mxu0
        %v294 = vadd.f32 0.0, %v293
        %v295 = vpop.f32.mrb[0].mxu0
        %296 = vmatprep.mubr.f32.mxu0 0.0
        %297 = vmatmul.mubr.f32.gmra.mrb[0].mxu0 %v191
        %v298 = vpop.f32.mrb[0].mxu0
        %v299 = vadd.f32 0.0, %v298
        %v300 = vpop.f32.mrb[0].mxu0
        %301 = vdwg.mxu0
        %v302 = vmul.f32 %v159, %v159
        %v303 = vmul.f32 %v160, %v160
        %v304 = vmul.f32 %v161, %v161
        %v305 = vmul.f32 %v162, %v162
        %v306 = vmul.f32 %v163, %v163
        %v307 = vmul.f32 %v164, %v164
        %v308 = vmul.f32 %v165, %v165
        %v309 = vmul.f32 %v166, %v166
        %v310 = vsel %vm168, %v302, 0.0
        %311 = vadd.xlane.f32.xlu0 %v310
        %v312 = vpop.xlane.xlu0 %311
        %v313 = vsel %vm168, %v303, 0.0
        %314 = vadd.xlane.f32.xlu0 %v313
        %v315 = vpop.xlane.xlu0 %314
        %v316 = vsel %vm168, %v304, 0.0
        %317 = vadd.xlane.f32.xlu0 %v316
        %v318 = vpop.xlane.xlu0 %317
        %v319 = vsel %vm168, %v305, 0.0
        %320 = vadd.xlane.f32.xlu0 %v319
        %v321 = vpop.xlane.xlu0 %320
        %v322 = vsel %vm168, %v306, 0.0
        %323 = vadd.xlane.f32.xlu0 %v322
        %v324 = vpop.xlane.xlu0 %323
        %v325 = vsel %vm168, %v307, 0.0
        %326 = vadd.xlane.f32.xlu0 %v325
        %v327 = vpop.xlane.xlu0 %326
        %v328 = vsel %vm168, %v308, 0.0
        %329 = vadd.xlane.f32.xlu0 %v328
        %v330 = vpop.xlane.xlu0 %329
        %v331 = vsel %vm168, %v309, 0.0
        %332 = vadd.xlane.f32.xlu0 %v331
        %v333 = vpop.xlane.xlu0 %332
        %v334 = vmul.f32 %v167, %v167
        %v335 = vsel %vm193, %v334, 0.0
        %v336 = vrot.slane %v335, 4
        %v337 = vadd.f32 %v335, %v336
        %v338 = vrot.slane %v337, 2
        %v339 = vadd.f32 %v337, %v338
        %v340 = vrot.slane %v339, 1
        %v341 = vadd.f32 %v339, %v340
        %v342 = vadd.f32 %v312, %v341
        %v343 = vadd.f32 %v315, %v341
        %v344 = vadd.f32 %v318, %v341
        %v345 = vadd.f32 %v321, %v341
        %v346 = vadd.f32 %v324, %v341
        %v347 = vadd.f32 %v327, %v341
        %v348 = vadd.f32 %v330, %v341
        %v349 = vadd.f32 %v333, %v341
        %v350 = vmul.f32 %v264, 2.0
        %v351 = vmul.f32 %v269, 2.0
        %v352 = vmul.f32 %v274, 2.0
        %v353 = vmul.f32 %v279, 2.0
        %v354 = vmul.f32 %v284, 2.0
        %v355 = vmul.f32 %v289, 2.0
        %v356 = vmul.f32 %v294, 2.0
        %v357 = vmul.f32 %v299, 2.0
        %v358 = vsub.f32 %v342, %v350
        %v359 = vsub.f32 %v343, %v351
        %v360 = vsub.f32 %v344, %v352
        %v361 = vsub.f32 %v345, %v353
        %v362 = vsub.f32 %v346, %v354
        %v363 = vsub.f32 %v347, %v355
        %v364 = vsub.f32 %v348, %v356
        %v365 = vsub.f32 %v349, %v357
        %v366 = vmax.f32 %v358, 0.0
        %v367 = vmax.f32 %v359, 0.0
        %v368 = vmax.f32 %v360, 0.0
        %v369 = vmax.f32 %v361, 0.0
        %v370 = vmax.f32 %v362, 0.0
        %v371 = vmax.f32 %v363, 0.0
        %v372 = vmax.f32 %v364, 0.0
        %v373 = vmax.f32 %v365, 0.0
        %v374 = vrsqrt.pop %v366
        %v375 = vmul.f32 %v366, %v374
        %vm376 = vcmp.eq.f32.partialorder %v366, inf
        %v377 = vsel %vm376, %v366, %v375
        %vm378 = vcmp.eq.f32.partialorder %v366, 0.0
        %v379 = vand.u32 %v366, 2147483648
        %v380 = vsel %vm378, %v379, %v377
        %v381 = vrsqrt.pop %v367
        %v382 = vmul.f32 %v367, %v381
        %vm383 = vcmp.eq.f32.partialorder %v367, inf
        %v384 = vsel %vm383, %v367, %v382
        %vm385 = vcmp.eq.f32.partialorder %v367, 0.0
        %v386 = vand.u32 %v367, 2147483648
        %v387 = vsel %vm385, %v386, %v384
        %v388 = vrsqrt.pop %v368
        %v389 = vmul.f32 %v368, %v388
        %vm390 = vcmp.eq.f32.partialorder %v368, inf
        %v391 = vsel %vm390, %v368, %v389
        %vm392 = vcmp.eq.f32.partialorder %v368, 0.0
        %v393 = vand.u32 %v368, 2147483648
        %v394 = vsel %vm392, %v393, %v391
        %v395 = vrsqrt.pop %v369
        %v396 = vmul.f32 %v369, %v395
        %vm397 = vcmp.eq.f32.partialorder %v369, inf
        %v398 = vsel %vm397, %v369, %v396
        %vm399 = vcmp.eq.f32.partialorder %v369, 0.0
        %v400 = vand.u32 %v369, 2147483648
        %v401 = vsel %vm399, %v400, %v398
        %v402 = vrsqrt.pop %v370
        %v403 = vmul.f32 %v370, %v402
        %vm404 = vcmp.eq.f32.partialorder %v370, inf
        %v405 = vsel %vm404, %v370, %v403
        %vm406 = vcmp.eq.f32.partialorder %v370, 0.0
        %v407 = vand.u32 %v370, 2147483648
        %v408 = vsel %vm406, %v407, %v405
        %v409 = vrsqrt.pop %v371
        %v410 = vmul.f32 %v371, %v409
        %vm411 = vcmp.eq.f32.partialorder %v371, inf
        %v412 = vsel %vm411, %v371, %v410
        %vm413 = vcmp.eq.f32.partialorder %v371, 0.0
        %v414 = vand.u32 %v371, 2147483648
        %v415 = vsel %vm413, %v414, %v412
        %v416 = vrsqrt.pop %v372
        %v417 = vmul.f32 %v372, %v416
        %vm418 = vcmp.eq.f32.partialorder %v372, inf
        %v419 = vsel %vm418, %v372, %v417
        %vm420 = vcmp.eq.f32.partialorder %v372, 0.0
        %v421 = vand.u32 %v372, 2147483648
        %v422 = vsel %vm420, %v421, %v419
        %v423 = vrsqrt.pop %v373
        %v424 = vmul.f32 %v373, %v423
        %vm425 = vcmp.eq.f32.partialorder %v373, inf
        %v426 = vsel %vm425, %v373, %v424
        %vm427 = vcmp.eq.f32.partialorder %v373, 0.0
        %v428 = vand.u32 %v373, 2147483648
        %v429 = vsel %vm427, %v428, %v426
        %v430 = vlaneseq
        %v431 = vshrl.u32 %v430, 7
        %v432 = vadd.s32 %v431, 8
        %v433 = vadd.s32 %v431, 16
        %v434 = vadd.s32 %v431, 24
        %v435 = vadd.s32 %v431, 32
        %v436 = vadd.s32 %v431, 40
        %v437 = vadd.s32 %v431, 48
        %v438 = vadd.s32 %v431, 56
        %v439 = vlaneseq
        %v440 = vand.u32 %v439, 127
        %vm441 = vcmp.lt.s32.totalorder %v431, 64
        %vm442 = vcmp.lt.s32.totalorder %v432, 64
        %vm443 = vcmp.lt.s32.totalorder %v433, 64
        %vm444 = vcmp.lt.s32.totalorder %v434, 64
        %vm445 = vcmp.lt.s32.totalorder %v435, 64
        %vm446 = vcmp.lt.s32.totalorder %v436, 64
        %vm447 = vcmp.lt.s32.totalorder %v437, 64
        %vm448 = vcmp.lt.s32.totalorder %v438, 64
        %v449 = vsel %vm441, 1.0, 0.0
        %v450 = vsel %vm442, 1.0, 0.0
        %v451 = vsel %vm443, 1.0, 0.0
        %v452 = vsel %vm444, 1.0, 0.0
        %v453 = vsel %vm445, 1.0, 0.0
        %v454 = vsel %vm446, 1.0, 0.0
        %v455 = vsel %vm447, 1.0, 0.0
        %v456 = vsel %vm448, 1.0, 0.0
        %vm457 = vcmp.lt.s32.totalorder %v440, 64
        %v458 = vsel %vm457, 1.0, 0.0
        loop: start=0, step=1, limit=11
        $region29: #{tpu_custom_call.1} parent=27 // loop_pre_header
          _
        $region30: #{tpu_custom_call.1} parent=27 // loop_header
          %s460 = sphi 0, %s464
          %p461 = scmp.ge.s32.totalorder %s460, 11
          %v465 = vphi %v449, %v976
          %v466 = vphi %v450, %v977
          %v467 = vphi %v451, %v978
          %v468 = vphi %v452, %v979
          %v469 = vphi %v453, %v980
          %v470 = vphi %v454, %v981
          %v471 = vphi %v455, %v982
          %v472 = vphi %v456, %v983
          %v473 = vphi %v458, %v1055
          %v474 = vphi 0.0, %v862
          %v475 = vphi 65536.0, %v1056
        $region31: #{tpu_custom_call.1} parent=27 // loop_header_branch
          %463 = sbr.rel (%p461) target = $region35
        $region32: #{tpu_custom_call.1} parent=27 // loop_body
          %p476 = scmp.eq.s32.totalorder %s460, 10
          %v477 = vsub.f32 0.0, %v475
          %s478 = scalar_select %p476, 1, 0
          %v479 = vstv %s478
          %vm480 = vcmp.eq.s32.totalorder %v479, 1
          %v481 = vsel %vm480, 0.0, %v477
          %v482 = vmul.f32 %v380, %v380
          %v483 = vmul.f32 %v387, %v387
          %v484 = vmul.f32 %v394, %v394
          %v485 = vmul.f32 %v401, %v401
          %v486 = vmul.f32 %v408, %v408
          %v487 = vmul.f32 %v415, %v415
          %v488 = vmul.f32 %v422, %v422
          %v489 = vmul.f32 %v429, %v429
          %v490 = vmul.f32 %v481, %v482
          %v491 = vmul.f32 %v481, %v483
          %v492 = vmul.f32 %v481, %v484
          %v493 = vmul.f32 %v481, %v485
          %v494 = vmul.f32 %v481, %v486
          %v495 = vmul.f32 %v481, %v487
          %v496 = vmul.f32 %v481, %v488
          %v497 = vmul.f32 %v481, %v489
          %v498 = vmul.f32 %v490, 1.442695
          %v499 = vpow.pop %v498
          %v500 = vmul.f32 %v491, 1.442695
          %v501 = vpow.pop %v500
          %v502 = vmul.f32 %v492, 1.442695
          %v503 = vpow.pop %v502
          %v504 = vmul.f32 %v493, 1.442695
          %v505 = vpow.pop %v504
          %v506 = vmul.f32 %v494, 1.442695
          %v507 = vpow.pop %v506
          %v508 = vmul.f32 %v495, 1.442695
          %v509 = vpow.pop %v508
          %v510 = vmul.f32 %v496, 1.442695
          %v511 = vpow.pop %v510
          %v512 = vmul.f32 %v497, 1.442695
          %v513 = vpow.pop %v512
          %v514 = vlaneseq
          %v515 = vshrl.u32 %v514, 7
          %v516 = vsub.s32 0, %v515
          %v517 = vrot.slane %v473, %v516
          %v518 = vmul.f32 %v499, %v517
          %v519 = vmul.f32 %v501, %v517
          %v520 = vmul.f32 %v503, %v517
          %v521 = vmul.f32 %v505, %v517
          %v522 = vmul.f32 %v507, %v517
          %v523 = vmul.f32 %v509, %v517
          %v524 = vmul.f32 %v511, %v517
          %v525 = vmul.f32 %v513, %v517
          %526 = vmatprep.subr.mxu0 0.0
          %527 = vmatpush1.msra.mxu0 1.0
          %528 = vmatprep.subr.mxu0 0.0
          %529 = vmatpush1.msra.mxu0 1.0
          %530 = vmatprep.subr.mxu0 0.0
          %531 = vmatpush1.msra.mxu0 1.0
          %532 = vmatprep.subr.mxu0 0.0
          %533 = vmatpush1.msra.mxu0 1.0
          %534 = vmatprep.subr.mxu0 0.0
          %535 = vmatpush1.msra.mxu0 1.0
          %536 = vmatprep.subr.mxu0 0.0
          %537 = vmatpush1.msra.mxu0 1.0
          %538 = vmatprep.subr.mxu0 0.0
          %539 = vmatpush1.msra.mxu0 1.0
          %540 = vmatprep.subr.mxu0 0.0
          %541 = vmatpush1.msra.mxu0 1.0
          %542 = vmatprep.subr.mxu0 0.0
          %543 = vmatpush1.msra.mxu0 1.0
          %544 = vmatprep.subr.mxu0 0.0
          %545 = vmatpush1.msra.mxu0 1.0
          %546 = vmatprep.subr.mxu0 0.0
          %547 = vmatpush1.msra.mxu0 1.0
          %548 = vmatprep.subr.mxu0 0.0
          %549 = vmatpush1.msra.mxu0 1.0
          %550 = vmatprep.subr.mxu0 0.0
          %551 = vmatpush1.msra.mxu0 1.0
          %552 = vmatprep.subr.mxu0 0.0
          %553 = vmatpush1.msra.mxu0 1.0
          %554 = vmatprep.subr.mxu0 0.0
          %555 = vmatpush1.msra.mxu0 1.0
          %556 = vmatprep.subr.mxu0 0.0
          %557 = vmatpush1.msra.mxu0 1.0
          %558 = vmatprep.subr.mxu0 0.0
          %559 = vmatpush1.msra.mxu0 0.0
          %560 = vmatprep.subr.mxu0 0.0
          %561 = vmatpush1.msra.mxu0 0.0
          %562 = vmatprep.subr.mxu0 0.0
          %563 = vmatpush1.msra.mxu0 0.0
          %564 = vmatprep.subr.mxu0 0.0
          %565 = vmatpush1.msra.mxu0 0.0
          %566 = vmatprep.subr.mxu0 0.0
          %567 = vmatpush1.msra.mxu0 0.0
          %568 = vmatprep.subr.mxu0 0.0
          %569 = vmatpush1.msra.mxu0 0.0
          %570 = vmatprep.subr.mxu0 0.0
          %571 = vmatpush1.msra.mxu0 0.0
          %572 = vmatprep.subr.mxu0 0.0
          %573 = vmatpush1.msra.mxu0 0.0
          %574 = vmatprep.subr.mxu0 0.0
          %575 = vmatpush1.msra.mxu0 0.0
          %576 = vmatprep.subr.mxu0 0.0
          %577 = vmatpush1.msra.mxu0 0.0
          %578 = vmatprep.subr.mxu0 0.0
          %579 = vmatpush1.msra.mxu0 0.0
          %580 = vmatprep.subr.mxu0 0.0
          %581 = vmatpush1.msra.mxu0 0.0
          %582 = vmatprep.subr.mxu0 0.0
          %583 = vmatpush1.msra.mxu0 0.0
          %584 = vmatprep.subr.mxu0 0.0
          %585 = vmatpush1.msra.mxu0 0.0
          %586 = vmatprep.subr.mxu0 0.0
          %587 = vmatpush1.msra.mxu0 0.0
          %588 = vmatprep.subr.mxu0 0.0
          %589 = vmatpush1.msra.mxu0 0.0
          %590 = vmatprep.mubr.f32.mxu0 0.0
          %591 = vmatmul.mubr.f32.gmra.mrb[0].mxu0 %v518
          %v592 = vpop.f32.mrb[0].mxu0
          %v593 = vadd.f32 1e-09, %v592
          %v594 = vpop.f32.mrb[0].mxu0
          %595 = vmatprep.mubr.f32.mxu0 0.0
          %596 = vmatmul.mubr.f32.gmra.mrb[0].mxu0 %v519
          %v597 = vpop.f32.mrb[0].mxu0
          %v598 = vadd.f32 1e-09, %v597
          %v599 = vpop.f32.mrb[0].mxu0
          %600 = vmatprep.mubr.f32.mxu0 0.0
          %601 = vmatmul.mubr.f32.gmra.mrb[0].mxu0 %v520
          %v602 = vpop.f32.mrb[0].mxu0
          %v603 = vadd.f32 1e-09, %v602
          %v604 = vpop.f32.mrb[0].mxu0
          %605 = vmatprep.mubr.f32.mxu0 0.0
          %606 = vmatmul.mubr.f32.gmra.mrb[0].mxu0 %v521
          %v607 = vpop.f32.mrb[0].mxu0
          %v608 = vadd.f32 1e-09, %v607
          %v609 = vpop.f32.mrb[0].mxu0
          %610 = vmatprep.mubr.f32.mxu0 0.0
          %611 = vmatmul.mubr.f32.gmra.mrb[0].mxu0 %v522
          %v612 = vpop.f32.mrb[0].mxu0
          %v613 = vadd.f32 1e-09, %v612
          %v614 = vpop.f32.mrb[0].mxu0
          %615 = vmatprep.mubr.f32.mxu0 0.0
          %616 = vmatmul.mubr.f32.gmra.mrb[0].mxu0 %v523
          %v617 = vpop.f32.mrb[0].mxu0
          %v618 = vadd.f32 1e-09, %v617
          %v619 = vpop.f32.mrb[0].mxu0
          %620 = vmatprep.mubr.f32.mxu0 0.0
          %621 = vmatmul.mubr.f32.gmra.mrb[0].mxu0 %v524
          %v622 = vpop.f32.mrb[0].mxu0
          %v623 = vadd.f32 1e-09, %v622
          %v624 = vpop.f32.mrb[0].mxu0
          %625 = vmatprep.mubr.f32.mxu0 0.0
          %626 = vmatmul.mubr.f32.gmra.mrb[0].mxu0 %v525
          %v627 = vpop.f32.mrb[0].mxu0
          %v628 = vadd.f32 1e-09, %v627
          %v629 = vpop.f32.mrb[0].mxu0
          %630 = vdwg.mxu0
          %v631 = vrcp.pop %v593
          %v632 = vrcp.pop %v598
          %v633 = vrcp.pop %v603
          %v634 = vrcp.pop %v608
          %v635 = vrcp.pop %v613
          %v636 = vrcp.pop %v618
          %v637 = vrcp.pop %v623
          %v638 = vrcp.pop %v628
          %v639 = vmul.f32 %v631, %v465
          %v640 = vmul.f32 %v632, %v466
          %v641 = vmul.f32 %v633, %v467
          %v642 = vmul.f32 %v634, %v468
          %v643 = vmul.f32 %v635, %v469
          %v644 = vmul.f32 %v636, %v470
          %v645 = vmul.f32 %v637, %v471
          %v646 = vmul.f32 %v638, %v472
          %648 = vset.pattern.permute.xlu0 0
          %649 = vperm.xlu0 %648, %v639
          %v650 = vpop.permute.xlu0 %649
          %653 = vset.pattern.permute.xlu0 0
          %654 = vperm.xlu0 %653, %v640
          %v655 = vpop.permute.xlu0 %654
          %658 = vset.pattern.permute.xlu0 0
          %659 = vperm.xlu0 %658, %v641
          %v660 = vpop.permute.xlu0 %659
          %663 = vset.pattern.permute.xlu0 0
          %664 = vperm.xlu0 %663, %v642
          %v665 = vpop.permute.xlu0 %664
          %668 = vset.pattern.permute.xlu0 0
          %669 = vperm.xlu0 %668, %v643
          %v670 = vpop.permute.xlu0 %669
          %673 = vset.pattern.permute.xlu0 0
          %674 = vperm.xlu0 %673, %v644
          %v675 = vpop.permute.xlu0 %674
          %678 = vset.pattern.permute.xlu0 0
          %679 = vperm.xlu0 %678, %v645
          %v680 = vpop.permute.xlu0 %679
          %683 = vset.pattern.permute.xlu0 0
          %684 = vperm.xlu0 %683, %v646
          %v685 = vpop.permute.xlu0 %684
          %v687 = vmul.f32 %v518, %v650
          %v688 = vmul.f32 %v519, %v655
          %v689 = vmul.f32 %v520, %v660
          %v690 = vmul.f32 %v521, %v665
          %v691 = vmul.f32 %v522, %v670
          %v692 = vmul.f32 %v523, %v675
          %v693 = vmul.f32 %v524, %v680
          %v694 = vmul.f32 %v525, %v685
          %vm695 = vcmask 523264
          %v697 = vsel %vm695, 1.0, 0
          %699 = vmatprep.subr.mxu0 0.0
          %700 = vmatpush1.msra.mxu0 %v687
          %701 = vmatprep.subr.mxu0 0.0
          %702 = vmatpush1.msra.mxu0 %v688
          %703 = vmatprep.subr.mxu0 0.0
          %704 = vmatpush1.msra.mxu0 %v689
          %705 = vmatprep.subr.mxu0 0.0
          %706 = vmatpush1.msra.mxu0 %v690
          %707 = vmatprep.subr.mxu0 0.0
          %708 = vmatpush1.msra.mxu0 %v691
          %709 = vmatprep.subr.mxu0 0.0
          %710 = vmatpush1.msra.mxu0 %v692
          %711 = vmatprep.subr.mxu0 0.0
          %712 = vmatpush1.msra.mxu0 %v693
          %713 = vmatprep.subr.mxu0 0.0
          %714 = vmatpush1.msra.mxu0 %v694
          %715 = vmatprep.subr.mxu0 0.0
          %716 = vmatpush1.msra.mxu0 0.0
          %717 = vmatprep.subr.mxu0 0.0
          %718 = vmatpush1.msra.mxu0 0.0
          %719 = vmatprep.subr.mxu0 0.0
          %720 = vmatpush1.msra.mxu0 0.0
          %721 = vmatprep.subr.mxu0 0.0
          %722 = vmatpush1.msra.mxu0 0.0
          %723 = vmatprep.subr.mxu0 0.0
          %724 = vmatpush1.msra.mxu0 0.0
          %725 = vmatprep.subr.mxu0 0.0
          %726 = vmatpush1.msra.mxu0 0.0
          %727 = vmatprep.subr.mxu0 0.0
          %728 = vmatpush1.msra.mxu0 0.0
          %729 = vmatprep.subr.mxu0 0.0
          %730 = vmatpush1.msra.mxu0 0.0
          %731 = vmatprep.subr.mxu0 0.0
          %732 = vmatpush1.msra.mxu0 0.0
          %733 = vmatprep.subr.mxu0 0.0
          %734 = vmatpush1.msra.mxu0 0.0
          %735 = vmatprep.subr.mxu0 0.0
          %736 = vmatpush1.msra.mxu0 0.0
          %737 = vmatprep.subr.mxu0 0.0
          %738 = vmatpush1.msra.mxu0 0.0
          %739 = vmatprep.subr.mxu0 0.0
          %740 = vmatpush1.msra.mxu0 0.0
          %741 = vmatprep.subr.mxu0 0.0
          %742 = vmatpush1.msra.mxu0 0.0
          %743 = vmatprep.subr.mxu0 0.0
          %744 = vmatpush1.msra.mxu0 0.0
          %745 = vmatprep.subr.mxu0 0.0
          %746 = vmatpush1.msra.mxu0 0.0
          %747 = vmatprep.subr.mxu0 0.0
          %748 = vmatpush1.msra.mxu0 0.0
          %749 = vmatprep.subr.mxu0 0.0
          %750 = vmatpush1.msra.mxu0 0.0
          %751 = vmatprep.subr.mxu0 0.0
          %752 = vmatpush1.msra.mxu0 0.0
          %753 = vmatprep.subr.mxu0 0.0
          %754 = vmatpush1.msra.mxu0 0.0
          %755 = vmatprep.subr.mxu0 0.0
          %756 = vmatpush1.msra.mxu0 0.0
          %757 = vmatprep.subr.mxu0 0.0
          %758 = vmatpush1.msra.mxu0 0.0
          %759 = vmatprep.subr.mxu0 0.0
          %760 = vmatpush1.msra.mxu0 0.0
          %761 = vmatprep.subr.mxu0 0.0
          %762 = vmatpush1.msra.mxu0 0.0
          %763 = vmatprep.mubr.f32.mxu0 0.0
          %764 = vmatmul.mubr.f32.gmra.mrb[0].mxu0 %v697
          %v765 = vpop.f32.mrb[0].mxu0
          %v766 = vadd.f32 1e-09, %v765
          %v767 = vpop.f32.mrb[0].mxu0
          %768 = vdwg.mxu0
          %v769 = vrcp.pop %v766
          %v770 = vmul.f32 %v473, %v769
          %v771 = vmin.f32 %v770, 1.0
          %v772 = vlaneseq
          %v773 = vshrl.u32 %v772, 7
          %v774 = vsub.s32 0, %v773
          %v775 = vrot.slane %v771, %v774
          %v776 = vmul.f32 %v687, %v775
          %v777 = vmul.f32 %v688, %v775
          %v778 = vmul.f32 %v689, %v775
          %v779 = vmul.f32 %v690, %v775
          %v780 = vmul.f32 %v691, %v775
          %v781 = vmul.f32 %v692, %v775
          %v782 = vmul.f32 %v693, %v775
          %v783 = vmul.f32 %v694, %v775
          %v784 = vmul.f32 %v776, %v380
          %v785 = vmul.f32 %v777, %v387
          %v786 = vmul.f32 %v778, %v394
          %v787 = vmul.f32 %v779, %v401
          %v788 = vmul.f32 %v780, %v408
          %v789 = vmul.f32 %v781, %v415
          %v790 = vmul.f32 %v782, %v422
          %v791 = vmul.f32 %v783, %v429
          %792 = vmatprep.subr.mxu0 0.0
          %793 = vmatpush1.msra.mxu0 %v784
          %794 = vmatprep.subr.mxu0 0.0
          %795 = vmatpush1.msra.mxu0 %v785
          %796 = vmatprep.subr.mxu0 0.0
          %797 = vmatpush1.msra.mxu0 %v786
          %798 = vmatprep.subr.mxu0 0.0
          %799 = vmatpush1.msra.mxu0 %v787
          %800 = vmatprep.subr.mxu0 0.0
          %801 = vmatpush1.msra.mxu0 %v788
          %802 = vmatprep.subr.mxu0 0.0
          %803 = vmatpush1.msra.mxu0 %v789
          %804 = vmatprep.subr.mxu0 0.0
          %805 = vmatpush1.msra.mxu0 %v790
          %806 = vmatprep.subr.mxu0 0.0
          %807 = vmatpush1.msra.mxu0 %v791
          %808 = vmatprep.subr.mxu0 0.0
          %809 = vmatpush1.msra.mxu0 0.0
          %810 = vmatprep.subr.mxu0 0.0
          %811 = vmatpush1.msra.mxu0 0.0
          %812 = vmatprep.subr.mxu0 0.0
          %813 = vmatpush1.msra.mxu0 0.0
          %814 = vmatprep.subr.mxu0 0.0
          %815 = vmatpush1.msra.mxu0 0.0
          %816 = vmatprep.subr.mxu0 0.0
          %817 = vmatpush1.msra.mxu0 0.0
          %818 = vmatprep.subr.mxu0 0.0
          %819 = vmatpush1.msra.mxu0 0.0
          %820 = vmatprep.subr.mxu0 0.0
          %821 = vmatpush1.msra.mxu0 0.0
          %822 = vmatprep.subr.mxu0 0.0
          %823 = vmatpush1.msra.mxu0 0.0
          %824 = vmatprep.subr.mxu0 0.0
          %825 = vmatpush1.msra.mxu0 0.0
          %826 = vmatprep.subr.mxu0 0.0
          %827 = vmatpush1.msra.mxu0 0.0
          %828 = vmatprep.subr.mxu0 0.0
          %829 = vmatpush1.msra.mxu0 0.0
          %830 = vmatprep.subr.mxu0 0.0
          %831 = vmatpush1.msra.mxu0 0.0
          %832 = vmatprep.subr.mxu0 0.0
          %833 = vmatpush1.msra.mxu0 0.0
          %834 = vmatprep.subr.mxu0 0.0
          %835 = vmatpush1.msra.mxu0 0.0
          %836 = vmatprep.subr.mxu0 0.0
          %837 = vmatpush1.msra.mxu0 0.0
          %838 = vmatprep.subr.mxu0 0.0
          %839 = vmatpush1.msra.mxu0 0.0
          %840 = vmatprep.subr.mxu0 0.0
          %841 = vmatpush1.msra.mxu0 0.0
          %842 = vmatprep.subr.mxu0 0.0
          %843 = vmatpush1.msra.mxu0 0.0
          %844 = vmatprep.subr.mxu0 0.0
          %845 = vmatpush1.msra.mxu0 0.0
          %846 = vmatprep.subr.mxu0 0.0
          %847 = vmatpush1.msra.mxu0 0.0
          %848 = vmatprep.subr.mxu0 0.0
          %849 = vmatpush1.msra.mxu0 0.0
          %850 = vmatprep.subr.mxu0 0.0
          %851 = vmatpush1.msra.mxu0 0.0
          %852 = vmatprep.subr.mxu0 0.0
          %853 = vmatpush1.msra.mxu0 0.0
          %854 = vmatprep.subr.mxu0 0.0
          %855 = vmatpush1.msra.mxu0 0.0
          %856 = vmatprep.mubr.f32.mxu0 0.0
          %857 = vmatmul.mubr.f32.gmra.mrb[0].mxu0 %v697
          %v858 = vpop.f32.mrb[0].mxu0
          %v859 = vadd.f32 0.0, %v858
          %v860 = vpop.f32.mrb[0].mxu0
          %861 = vdwg.mxu0
          %v862 = vadd.f32 %v474, %v859
          %863 = vmatprep.subr.mxu0 0.0
          %864 = vmatpush1.msra.mxu0 1.0
          %865 = vmatprep.subr.mxu0 0.0
          %866 = vmatpush1.msra.mxu0 1.0
          %867 = vmatprep.subr.mxu0 0.0
          %868 = vmatpush1.msra.mxu0 1.0
          %869 = vmatprep.subr.mxu0 0.0
          %870 = vmatpush1.msra.mxu0 1.0
          %871 = vmatprep.subr.mxu0 0.0
          %872 = vmatpush1.msra.mxu0 1.0
          %873 = vmatprep.subr.mxu0 0.0
          %874 = vmatpush1.msra.mxu0 1.0
          %875 = vmatprep.subr.mxu0 0.0
          %876 = vmatpush1.msra.mxu0 1.0
          %877 = vmatprep.subr.mxu0 0.0
          %878 = vmatpush1.msra.mxu0 1.0
          %879 = vmatprep.subr.mxu0 0.0
          %880 = vmatpush1.msra.mxu0 1.0
          %881 = vmatprep.subr.mxu0 0.0
          %882 = vmatpush1.msra.mxu0 1.0
          %883 = vmatprep.subr.mxu0 0.0
          %884 = vmatpush1.msra.mxu0 1.0
          %885 = vmatprep.subr.mxu0 0.0
          %886 = vmatpush1.msra.mxu0 1.0
          %887 = vmatprep.subr.mxu0 0.0
          %888 = vmatpush1.msra.mxu0 1.0
          %889 = vmatprep.subr.mxu0 0.0
          %890 = vmatpush1.msra.mxu0 1.0
          %891 = vmatprep.subr.mxu0 0.0
          %892 = vmatpush1.msra.mxu0 1.0
          %893 = vmatprep.subr.mxu0 0.0
          %894 = vmatpush1.msra.mxu0 1.0
          %895 = vmatprep.subr.mxu0 0.0
          %896 = vmatpush1.msra.mxu0 0.0
          %897 = vmatprep.subr.mxu0 0.0
          %898 = vmatpush1.msra.mxu0 0.0
          %899 = vmatprep.subr.mxu0 0.0
          %900 = vmatpush1.msra.mxu0 0.0
          %901 = vmatprep.subr.mxu0 0.0
          %902 = vmatpush1.msra.mxu0 0.0
          %903 = vmatprep.subr.mxu0 0.0
          %904 = vmatpush1.msra.mxu0 0.0
          %905 = vmatprep.subr.mxu0 0.0
          %906 = vmatpush1.msra.mxu0 0.0
          %907 = vmatprep.subr.mxu0 0.0
          %908 = vmatpush1.msra.mxu0 0.0
          %909 = vmatprep.subr.mxu0 0.0
          %910 = vmatpush1.msra.mxu0 0.0
          %911 = vmatprep.subr.mxu0 0.0
          %912 = vmatpush1.msra.mxu0 0.0
          %913 = vmatprep.subr.mxu0 0.0
          %914 = vmatpush1.msra.mxu0 0.0
          %915 = vmatprep.subr.mxu0 0.0
          %916 = vmatpush1.msra.mxu0 0.0
          %917 = vmatprep.subr.mxu0 0.0
          %918 = vmatpush1.msra.mxu0 0.0
          %919 = vmatprep.subr.mxu0 0.0
          %920 = vmatpush1.msra.mxu0 0.0
          %921 = vmatprep.subr.mxu0 0.0
          %922 = vmatpush1.msra.mxu0 0.0
          %923 = vmatprep.subr.mxu0 0.0
          %924 = vmatpush1.msra.mxu0 0.0
          %925 = vmatprep.subr.mxu0 0.0
          %926 = vmatpush1.msra.mxu0 0.0
          %927 = vmatprep.mubr.f32.mxu0 0.0
          %928 = vmatmul.mubr.f32.gmra.mrb[0].mxu0 %v776
          %v929 = vpop.f32.mrb[0].mxu0
          %v930 = vadd.f32 0.0, %v929
          %v931 = vpop.f32.mrb[0].mxu0
          %932 = vmatprep.mubr.f32.mxu0 0.0
          %933 = vmatmul.mubr.f32.gmra.mrb[0].mxu0 %v777
          %v934 = vpop.f32.mrb[0].mxu0
          %v935 = vadd.f32 0.0, %v934
          %v936 = vpop.f32.mrb[0].mxu0
          %937 = vmatprep.mubr.f32.mxu0 0.0
          %938 = vmatmul.mubr.f32.gmra.mrb[0].mxu0 %v778
          %v939 = vpop.f32.mrb[0].mxu0
          %v940 = vadd.f32 0.0, %v939
          %v941 = vpop.f32.mrb[0].mxu0
          %942 = vmatprep.mubr.f32.mxu0 0.0
          %943 = vmatmul.mubr.f32.gmra.mrb[0].mxu0 %v779
          %v944 = vpop.f32.mrb[0].mxu0
          %v945 = vadd.f32 0.0, %v944
          %v946 = vpop.f32.mrb[0].mxu0
          %947 = vmatprep.mubr.f32.mxu0 0.0
          %948 = vmatmul.mubr.f32.gmra.mrb[0].mxu0 %v780
          %v949 = vpop.f32.mrb[0].mxu0
          %v950 = vadd.f32 0.0, %v949
          %v951 = vpop.f32.mrb[0].mxu0
          %952 = vmatprep.mubr.f32.mxu0 0.0
          %953 = vmatmul.mubr.f32.gmra.mrb[0].mxu0 %v781
          %v954 = vpop.f32.mrb[0].mxu0
          %v955 = vadd.f32 0.0, %v954
          %v956 = vpop.f32.mrb[0].mxu0
          %957 = vmatprep.mubr.f32.mxu0 0.0
          %958 = vmatmul.mubr.f32.gmra.mrb[0].mxu0 %v782
          %v959 = vpop.f32.mrb[0].mxu0
          %v960 = vadd.f32 0.0, %v959
          %v961 = vpop.f32.mrb[0].mxu0
          %962 = vmatprep.mubr.f32.mxu0 0.0
          %963 = vmatmul.mubr.f32.gmra.mrb[0].mxu0 %v783
          %v964 = vpop.f32.mrb[0].mxu0
          %v965 = vadd.f32 0.0, %v964
          %v966 = vpop.f32.mrb[0].mxu0
          %967 = vdwg.mxu0
          %v968 = vsub.f32 %v465, %v930
          %v969 = vsub.f32 %v466, %v935
          %v970 = vsub.f32 %v467, %v940
          %v971 = vsub.f32 %v468, %v945
          %v972 = vsub.f32 %v469, %v950
          %v973 = vsub.f32 %v470, %v955
          %v974 = vsub.f32 %v471, %v960
          %v975 = vsub.f32 %v472, %v965
          %v976 = vmax.f32 %v968, 0.0
          %v977 = vmax.f32 %v969, 0.0
          %v978 = vmax.f32 %v970, 0.0
          %v979 = vmax.f32 %v971, 0.0
          %v980 = vmax.f32 %v972, 0.0
          %v981 = vmax.f32 %v973, 0.0
          %v982 = vmax.f32 %v974, 0.0
          %v983 = vmax.f32 %v975, 0.0
          %984 = vmatprep.subr.mxu0 0.0
          %985 = vmatpush1.msra.mxu0 %v776
          %986 = vmatprep.subr.mxu0 0.0
          %987 = vmatpush1.msra.mxu0 %v777
          %988 = vmatprep.subr.mxu0 0.0
          %989 = vmatpush1.msra.mxu0 %v778
          %990 = vmatprep.subr.mxu0 0.0
          %991 = vmatpush1.msra.mxu0 %v779
          %992 = vmatprep.subr.mxu0 0.0
          %993 = vmatpush1.msra.mxu0 %v780
          %994 = vmatprep.subr.mxu0 0.0
          %995 = vmatpush1.msra.mxu0 %v781
          %996 = vmatprep.subr.mxu0 0.0
          %997 = vmatpush1.msra.mxu0 %v782
          %998 = vmatprep.subr.mxu0 0.0
          %999 = vmatpush1.msra.mxu0 %v783
          %1000 = vmatprep.subr.mxu0 0.0
          %1001 = vmatpush1.msra.mxu0 0.0
          %1002 = vmatprep.subr.mxu0 0.0
          %1003 = vmatpush1.msra.mxu0 0.0
          %1004 = vmatprep.subr.mxu0 0.0
          %1005 = vmatpush1.msra.mxu0 0.0
          %1006 = vmatprep.subr.mxu0 0.0
          %1007 = vmatpush1.msra.mxu0 0.0
          %1008 = vmatprep.subr.mxu0 0.0
          %1009 = vmatpush1.msra.mxu0 0.0
          %1010 = vmatprep.subr.mxu0 0.0
          %1011 = vmatpush1.msra.mxu0 0.0
          %1012 = vmatprep.subr.mxu0 0.0
          %1013 = vmatpush1.msra.mxu0 0.0
          %1014 = vmatprep.subr.mxu0 0.0
          %1015 = vmatpush1.msra.mxu0 0.0
          %1016 = vmatprep.subr.mxu0 0.0
          %1017 = vmatpush1.msra.mxu0 0.0
          %1018 = vmatprep.subr.mxu0 0.0
          %1019 = vmatpush1.msra.mxu0 0.0
          %1020 = vmatprep.subr.mxu0 0.0
          %1021 = vmatpush1.msra.mxu0 0.0
          %1022 = vmatprep.subr.mxu0 0.0
          %1023 = vmatpush1.msra.mxu0 0.0
          %1024 = vmatprep.subr.mxu0 0.0
          %1025 = vmatpush1.msra.mxu0 0.0
          %1026 = vmatprep.subr.mxu0 0.0
          %1027 = vmatpush1.msra.mxu0 0.0
          %1028 = vmatprep.subr.mxu0 0.0
          %1029 = vmatpush1.msra.mxu0 0.0
          %1030 = vmatprep.subr.mxu0 0.0
          %1031 = vmatpush1.msra.mxu0 0.0
          %1032 = vmatprep.subr.mxu0 0.0
          %1033 = vmatpush1.msra.mxu0 0.0
          %1034 = vmatprep.subr.mxu0 0.0
          %1035 = vmatpush1.msra.mxu0 0.0
          %1036 = vmatprep.subr.mxu0 0.0
          %1037 = vmatpush1.msra.mxu0 0.0
          %1038 = vmatprep.subr.mxu0 0.0
          %1039 = vmatpush1.msra.mxu0 0.0
          %1040 = vmatprep.subr.mxu0 0.0
          %1041 = vmatpush1.msra.mxu0 0.0
          %1042 = vmatprep.subr.mxu0 0.0
          %1043 = vmatpush1.msra.mxu0 0.0
          %1044 = vmatprep.subr.mxu0 0.0
          %1045 = vmatpush1.msra.mxu0 0.0
          %1046 = vmatprep.subr.mxu0 0.0
          %1047 = vmatpush1.msra.mxu0 0.0
          %1048 = vmatprep.mubr.f32.mxu0 0.0
          %1049 = vmatmul.mubr.f32.gmra.mrb[0].mxu0 %v697
          %v1050 = vpop.f32.mrb[0].mxu0
          %v1051 = vadd.f32 0.0, %v1050
          %v1052 = vpop.f32.mrb[0].mxu0
          %1053 = vdwg.mxu0
          %v1054 = vsub.f32 %v473, %v1051
          %v1055 = vmax.f32 %v1054, 0.0
          %v1056 = vmul.f32 %v475, 0.25
        $region33: #{tpu_custom_call.1} parent=27 // loop_footer
          %s464 = sadd.s32 1, %s460
        $region34: #{tpu_custom_call.1} parent=27 // loop_footer_branch
          %459 = sbr.rel target = $region30
        $region35: #{tpu_custom_call.1} parent=27 // loop_exit
          _
        %vm1057 = vcmask 1040384
        %v1058 = vsel %vm1057, %v474, 0.0
        %1059 = vadd.xlane.f32.xlu0 %v1058
        %v1060 = vpop.xlane.xlu0 %1059
        %v1061 = vrot.slane %v1060, 4
        %v1062 = vadd.f32 %v1060, %v1061
        %v1063 = vrot.slane %v1062, 2
        %v1064 = vadd.f32 %v1062, %v1063
        %v1065 = vrot.slane %v1064, 1
        %v1066 = vadd.f32 %v1064, %v1065
        %s1067 = vtos %v1066
        %v1068 = vstv %s1067
        %1069 = vst [vmem:[%s149] sm:$0xff] %v1068
        %s1070 = sand.u32 %s76, 1
        %s1071 = scalar_lea.sflag [#allocation3], %s1070
        %s1072 = sand.u32 %s76, 1
        %s1073 = smul.addr %s1072, 8
        %s1074 = scalar_lea.vmem [#allocation2], %s1073
        // Predicated region
        $region36: #{tpu_custom_call.1} parent=27 // pred_check
          %p1075 = pneg %p86
        $region37: #{tpu_custom_call.1} parent=27 // pred_check_branch
          %1077 = sbr.rel (%p1075) target = $region39
        $region38: #{tpu_custom_call.1} parent=27 // pred_region
          %s1079 = ssub.s32 128, 128
          %1080 = vsyncadd %s1071, %s1079
          %s1081 = smul.addr %s16, 128
          %s1082 = scalar_lea.hbm %s2, %s1081
          %s1084 = sshll.u32 %s1074, 4
          %s1085 = int_to_ptr.vmem [resolvable:$true] %s1084
          %1087 = dma.vmem_to_hbm [thread:$0]  %s1085, 128, %s1082, %s1071
        $region39: #{tpu_custom_call.1} parent=27 // pred_fallthru
          _
      $region28: #{tpu_custom_call.1} parent=5 // pred_fallthru
        _
      %p1088 = scmp.le.s32.totalorder 2, %s11
      // Predicated region
      $region40: #{tpu_custom_call.1} parent=5 // pred_check
        %p1089 = pneg %p1088
      $region41: #{tpu_custom_call.1} parent=5 // pred_check_branch
        %1091 = sbr.rel (%p1089) target = $region43
      $region42: #{tpu_custom_call.1} parent=5 // pred_region
        %s1092 = ssub.s32 %s11, 2
        // Predicated region
        $region44: #{tpu_custom_call.1} parent=42 // pred_check
          %p1093 = pneg %p92
        $region45: #{tpu_custom_call.1} parent=42 // pred_check_branch
          %1095 = sbr.rel (%p1093) target = $region47
        $region46: #{tpu_custom_call.1} parent=42 // pred_region
          %s1096 = sand.u32 %s77, 1
          %s1097 = scalar_lea.sflag [#allocation3], %s1096
          %s1098 = sand.u32 %s77, 1
          %s1099 = smul.addr %s1098, 8
          %s1100 = scalar_lea.vmem [#allocation2], %s1099
          %1101 = dma.done %s1097, 128
        $region47: #{tpu_custom_call.1} parent=42 // pred_fallthru
          _
      $region43: #{tpu_custom_call.1} parent=5 // pred_fallthru
        _
    $region6: #{tpu_custom_call.1} parent=1 // loop_footer
      %s15 = sadd.s32 1, %s11
    $region7: #{tpu_custom_call.1} parent=1 // loop_footer_branch
      %10 = sbr.rel target = $region3
    $region8: #{tpu_custom_call.1} parent=1 // loop_exit
      _
    %1102 = vsyncpa [#allocation3], 1
    %s1103 = scalar_lea.sflag [#allocation3], 1
    %1104 = vsyncpa %s1103, 1

</llo_original>
